<compile_context>
chip_gen: v5e
topology: v5e:2x2
jax: 0.10.0
libtpu: 0.0.40
codegen_flags: <defaults>
</compile_context>

<pallas_src>
import math

import jax
import jax.numpy as jnp
from jax.experimental import pallas as pl
from jax.experimental.pallas import tpu as pltpu


def _round_up(x, m):
    return ((x + m - 1) // m) * m


def _make_head_kernel(num_hidden_layers, num_graphs_padded, tile_n, agg, pool_dtype):
    """Kernel closure: L hidden (ReLU) layers + 1 output layer, pooled over N tiles."""
    L = num_hidden_layers

    def kernel(*refs):
        # refs layout:
        #   refs[0]                 batch ids   (1, TILE_N)      int32
        #   refs[1]                 x tile      (TILE_N, D_in)   pool_dtype
        #   refs[2 : 2+2(L+1)]      (w, b) pairs, VMEM-resident
        #   refs[2+2(L+1)]          out         (G_pad, DO_pad)  f32
        #   refs[-2]                pooled acc  (G_pad, D_in)    f32 scratch
        #   refs[-1]                count acc   (G_pad, 1)       f32 scratch
        batch_ref = refs[0]
        x_ref = refs[1]
        wb_refs = refs[2:2 + 2 * (L + 1)]
        out_ref = refs[2 + 2 * (L + 1)]
        pooled_acc = refs[-2]
        count_acc = refs[-1]

        step = pl.program_id(0)

        @pl.when(step == 0)
        def _init():
            pooled_acc[...] = jnp.zeros_like(pooled_acc)
            count_acc[...] = jnp.zeros_like(count_acc)

        # Build the one-hot pooling selector for this node tile on the VPU.
        batch_tile = batch_ref[...]                                          # (1, TILE_N)
        g_ids = jax.lax.broadcasted_iota(
            jnp.int32, (num_graphs_padded, tile_n), 0)                       # (G_pad, TILE_N)
        match = g_ids == batch_tile                                          # sublane-broadcast
        ones = jnp.where(match, 1.0, 0.0)                                    # f32 0/1
        seg = ones.astype(pool_dtype)

        # Segment-sum this tile on the MXU, accumulate in f32.
        pooled_acc[...] += jnp.dot(seg, x_ref[...],
                                   preferred_element_type=jnp.float32)
        if agg != "sum":
            count_acc[...] += jnp.sum(ones, axis=1, keepdims=True)

        # Epilogue: normalize + MLP + lane-dense store, exactly once.
        @pl.when(step == pl.num_programs(0) - 1)
        def _finalize():
            h = pooled_acc[...]
            if agg != "sum":
                inv = pl.reciprocal(jnp.maximum(count_acc[...], 1.0))
                h = h * inv
            for l in range(L):
                w = wb_refs[2 * l][...]
                b = wb_refs[2 * l + 1][...]
                h = jnp.maximum(
                    jnp.dot(h, w, preferred_element_type=jnp.float32) + b, 0.0)
            w = wb_refs[-2][...]
            b = wb_refs[-1][...]
            out_ref[...] = (
                jnp.dot(h, w, preferred_element_type=jnp.float32) + b)

    return kernel


def san_prediction_head(x, batch, params, num_graphs, L, agg="mean",
                        tile_n=512, pool_dtype=jnp.float32):
    """Runs the SAN prediction head.

    x:      [N_nodes, dim_in]  float node features
    batch:  [N_nodes]          int32 graph index per node
    params: list of (W[in,out], b[1,out]) for the L+1 linear layers
    pool_dtype: set to jnp.bfloat16 to halve HBM traffic of the x stream
                (accumulation stays f32 via preferred_element_type).
    """
    n_nodes, dim_in = x.shape
    dim_out = params[-1][0].shape[1]

    g_pad = _round_up(max(num_graphs, 1), 8)           # sublane-aligned graph dim
    do_pad = _round_up(max(dim_out, 1), 128)           # lane-dense output slab
    tile_n = max(128, _round_up(tile_n, 128))          # lane/MXU-aligned node tile
    n_pad = _round_up(max(n_nodes, 1), tile_n)
    n_tiles = n_pad // tile_n
    # NOTE: for very large dim_in, shrink tile_n (esp. on v7x, 64 MiB VMEM) so
    # 2 * tile_n * dim_in * itemsize stays well inside the scoped VMEM limit.

    # Pad nodes: feature rows with zeros, batch ids with -1 (matches no graph).
    x_p = jnp.zeros((n_pad, dim_in), pool_dtype).at[:n_nodes].set(
        x.astype(pool_dtype))
    batch_p = jnp.full((1, n_pad), -1, jnp.int32).at[0, :n_nodes].set(
        batch.astype(jnp.int32))

    # Weights stored [in, out].  Last layer is lane-padded (dim_out -> do_pad)
    # with zeros so the final store is an unmasked, lane-dense vst.
    flat_wb = []
    for l, (w, b) in enumerate(params):
        w = w.astype(jnp.float32)
        b = b.astype(jnp.float32).reshape(1, -1)
        if l == L:
            w = jnp.zeros((w.shape[0], do_pad), jnp.float32).at[:, :dim_out].set(w)
            b = jnp.zeros((1, do_pad), jnp.float32).at[:, :dim_out].set(b)
        flat_wb.extend([w, b])

    inputs = [batch_p, x_p] + flat_wb

    in_specs = [
        pl.BlockSpec((1, tile_n), lambda i: (0, i)),        # batch ids: stream over N
        pl.BlockSpec((tile_n, dim_in), lambda i: (i, 0)),   # x: stream over N
    ]
    # Weights/biases: same block every step -> VMEM-resident, not re-DMA'd.
    for arr in flat_wb:
        in_specs.append(pl.BlockSpec(arr.shape, lambda i: (0, 0)))

    out_specs = pl.BlockSpec((g_pad, do_pad), lambda i: (0, 0))
    out_shape = jax.ShapeDtypeStruct((g_pad, do_pad), jnp.float32)

    scratch_shapes = [
        pltpu.VMEM((g_pad, dim_in), jnp.float32),   # pooled accumulator
        pltpu.VMEM((g_pad, 1), jnp.float32),        # per-graph node counts
    ]

    # Advisory cost estimate (pooling matmul dominates; MLP is tiny).
    mlp_flops = sum(2 * g_pad * w.shape[0] * w.shape[1] for w, _ in params)
    itemsize = jnp.dtype(pool_dtype).itemsize
    cost = pl.CostEstimate(
        flops=int(2 * g_pad * n_pad * dim_in + mlp_flops),
        transcendentals=0,
        bytes_accessed=int(
            n_pad * dim_in * itemsize            # x stream
            + n_pad * 4                          # batch ids
            + sum(a.size * 4 for a in flat_wb)   # weights / biases
            + g_pad * do_pad * 4),               # output
    )

    kernel = _make_head_kernel(L, g_pad, tile_n, agg, pool_dtype)

    out = pl.pallas_call(
        kernel,
        out_shape=out_shape,
        grid=(n_tiles,),
        in_specs=in_specs,
        out_specs=out_specs,
        scratch_shapes=scratch_shapes,
        compiler_params=pltpu.CompilerParams(
            dimension_semantics=("arbitrary",),   # N axis is a reduction
        ),
        cost_estimate=cost,
    )(*inputs)

    # Strip graph / output-lane padding.
    return out[:num_graphs, :dim_out]


def init_params(key, dim_in, dim_out, L):
    """Deterministic nn.Linear-style init.  Weights stored [in, out]."""
    params = []
    in_dims = [dim_in // (2 ** l) for l in range(L + 1)]
    out_dims = [dim_in // (2 ** (l + 1)) for l in range(L)] + [dim_out]
    for di, do in zip(in_dims, out_dims):
        kw, kb, key = jax.random.split(key, 3)
        bound = 1.0 / math.sqrt(di)
        w = jax.random.uniform(kw, (di, do), jnp.float32, -bound, bound)
        b = jax.random.uniform(kb, (1, do), jnp.float32, -bound, bound)
        params.append((w, b))
    return params


def reference_forward(x, batch, params, num_graphs, L, agg="mean"):
    """Pure-JAX reference for correctness checking."""
    onehot = (batch[None, :] == jnp.arange(num_graphs)[:, None]).astype(jnp.float32)
    pooled = onehot @ x.astype(jnp.float32)
    if agg != "sum":
        counts = jnp.maximum(jnp.sum(onehot, axis=1, keepdims=True), 1.0)
        pooled = pooled / counts
    h = pooled
    for l in range(L):
        w, b = params[l]
        h = jnp.maximum(h @ w + b, 0.0)
    w, b = params[L]
    return h @ w + b


if __name__ == "__main__":
    key = jax.random.PRNGKey(0)

    # Small shapes consistent with the module.
    dim_in = 32
    dim_out = 4
    L = 2
    n_nodes = 16
    num_graphs = 2

    kx, kb, kp = jax.random.split(key, 3)
    x = jax.random.normal(kx, (n_nodes, dim_in), jnp.float32)
    # Deterministic node->graph assignment (sorted, like torch_geometric batches).
    batch = jnp.sort(
        jax.random.randint(kb, (n_nodes,), 0, num_graphs)).astype(jnp.int32)

    params = init_params(kp, dim_in, dim_out, L)

    out = san_prediction_head(x, batch, params, num_graphs, L, agg="mean")
    out = jax.block_until_ready(out)

    ref = reference_forward(x, batch, params, num_graphs, L, agg="mean")
    assert out.shape == (num_graphs, dim_out)
    assert jnp.allclose(out, ref, atol=1e-4, rtol=1e-4), "mismatch vs reference"

    # Also exercise the 'sum' aggregation branch of the module.
    out_sum = jax.block_until_ready(
        san_prediction_head(x, batch, params, num_graphs, L, agg="sum"))
    ref_sum = reference_forward(x, batch, params, num_graphs, L, agg="sum")
    assert jnp.allclose(out_sum, ref_sum, atol=1e-4, rtol=1e-4), "sum-pool mismatch"

    print("KERNEL_OK")
</pallas_src>

<mosaic_0001>
module attributes {stable_mosaic.version = 11 : i64} {
  func.func @kernel(%arg0: i32, %arg1: memref<1x512xi32, #tpu.memory_space<vmem>>, %arg2: memref<512x32xf32, #tpu.memory_space<vmem>>, %arg3: memref<32x16xf32, #tpu.memory_space<vmem>>, %arg4: memref<1x16xf32, #tpu.memory_space<vmem>>, %arg5: memref<16x8xf32, #tpu.memory_space<vmem>>, %arg6: memref<1x8xf32, #tpu.memory_space<vmem>>, %arg7: memref<8x128xf32, #tpu.memory_space<vmem>>, %arg8: memref<1x128xf32, #tpu.memory_space<vmem>>, %arg9: memref<8x128xf32, #tpu.memory_space<vmem>>, %arg10: memref<8x32xf32, #tpu.memory_space<vmem>>, %arg11: memref<8x1xf32, #tpu.memory_space<vmem>>) attributes {dimension_semantics = [#tpu.dimension_semantics<arbitrary>], iteration_bounds = array<i64: 1>, scalar_prefetch = 0 : i64, scratch_operands = 2 : i64, tpu.core_type = #tpu.core_type<tc>, window_params = [{transform_indices = @transform_0, window_bounds = array<i64: 1, 512>}, {transform_indices = @transform_1, window_bounds = array<i64: 512, 32>}, {pipeline_mode = #tpu.pipeline_mode<synchronous>, transform_indices = @transform_2, window_bounds = array<i64: 32, 16>}, {pipeline_mode = #tpu.pipeline_mode<synchronous>, transform_indices = @transform_3, window_bounds = array<i64: 1, 16>}, {pipeline_mode = #tpu.pipeline_mode<synchronous>, transform_indices = @transform_4, window_bounds = array<i64: 16, 8>}, {pipeline_mode = #tpu.pipeline_mode<synchronous>, transform_indices = @transform_5, window_bounds = array<i64: 1, 8>}, {pipeline_mode = #tpu.pipeline_mode<synchronous>, transform_indices = @transform_6, window_bounds = array<i64: 8, 128>}, {pipeline_mode = #tpu.pipeline_mode<synchronous>, transform_indices = @transform_7, window_bounds = array<i64: 1, 128>}, {pipeline_mode = #tpu.pipeline_mode<synchronous>, transform_indices = @transform_8, window_bounds = array<i64: 8, 128>}]} {
    %c0_i32 = arith.constant 0 : i32
    %0 = arith.cmpi eq, %arg0, %c0_i32 : i32
    %1 = arith.extui %0 : i1 to i32
    %c0_i32_0 = arith.constant 0 : i32
    %2 = arith.cmpi ne, %1, %c0_i32_0 : i32
    scf.if %2 {
      %cst_17 = arith.constant 0.000000e+00 : f32
      %23 = vector.broadcast %cst_17 : f32 to vector<8x32xf32>
      %c0_18 = arith.constant 0 : index
      %c0_19 = arith.constant 0 : index
      %24 = vector.load %arg10[%c0_18, %c0_19] : memref<8x32xf32, #tpu.memory_space<vmem>>, vector<8x32xf32>
      tpu.vector_store %arg10[%c0_18, %c0_19], %23 {strides = array<i32>} : memref<8x32xf32, #tpu.memory_space<vmem>>, vector<8x32xf32>,
      %cst_20 = arith.constant 0.000000e+00 : f32
      %25 = vector.broadcast %cst_20 : f32 to vector<8x1xf32>
      %c0_21 = arith.constant 0 : index
      %c0_22 = arith.constant 0 : index
      %26 = vector.load %arg11[%c0_21, %c0_22] : memref<8x1xf32, #tpu.memory_space<vmem>>, vector<8x1xf32>
      tpu.vector_store %arg11[%c0_21, %c0_22], %25 {strides = array<i32>} : memref<8x1xf32, #tpu.memory_space<vmem>>, vector<8x1xf32>,
    } else {
    }
    %c0 = arith.constant 0 : index
    %c0_1 = arith.constant 0 : index
    %3 = vector.load %arg1[%c0, %c0_1] : memref<1x512xi32, #tpu.memory_space<vmem>>, vector<1x512xi32>
    %4 = tpu.iota {dimensions = array<i32: 0>} : vector<8x512xi32>
    %5 = vector.broadcast %3 : vector<1x512xi32> to vector<8x512xi32>
    %6 = arith.cmpi eq, %4, %5 : vector<8x512xi32>
    %cst = arith.constant 1.000000e+00 : f32
    %cst_2 = arith.constant 0.000000e+00 : f32
    %7 = vector.broadcast %cst : f32 to vector<8x512xf32>
    %8 = vector.broadcast %cst_2 : f32 to vector<8x512xf32>
    %9 = arith.select %6, %7, %8 : vector<8x512xi1>, vector<8x512xf32>
    %c0_3 = arith.constant 0 : index
    %c0_4 = arith.constant 0 : index
    %10 = vector.load %arg10[%c0_3, %c0_4] : memref<8x32xf32, #tpu.memory_space<vmem>>, vector<8x32xf32>
    %c0_5 = arith.constant 0 : index
    %c0_6 = arith.constant 0 : index
    %11 = vector.load %arg2[%c0_5, %c0_6] : memref<512x32xf32, #tpu.memory_space<vmem>>, vector<512x32xf32>
    %cst_7 = arith.constant dense<0.000000e+00> : vector<8x32xf32>
    %12 = tpu.matmul %9, %11, %cst_7 {dimension_numbers = #tpu.dot_dimension_numbers<[1], [0], [0], [1], [0, 0, 1, 1], [], []>} : vector<8x512xf32>, vector<512x32xf32>, vector<8x32xf32> -> vector<8x32xf32>
    %13 = arith.addf %10, %12 : vector<8x32xf32>
    %c0_8 = arith.constant 0 : index
    %c0_9 = arith.constant 0 : index
    %14 = vector.load %arg10[%c0_8, %c0_9] : memref<8x32xf32, #tpu.memory_space<vmem>>, vector<8x32xf32>
    tpu.vector_store %arg10[%c0_8, %c0_9], %13 {strides = array<i32>} : memref<8x32xf32, #tpu.memory_space<vmem>>, vector<8x32xf32>,
    %c0_10 = arith.constant 0 : index
    %c0_11 = arith.constant 0 : index
    %15 = vector.load %arg11[%c0_10, %c0_11] : memref<8x1xf32, #tpu.memory_space<vmem>>, vector<8x1xf32>
    %cst_12 = arith.constant dense<0.000000e+00> : vector<8xf32>
    %16 = vector.multi_reduction <add>, %9, %cst_12 [1] : vector<8x512xf32> to vector<8xf32>
    %17 = vector.shape_cast %16 : vector<8xf32> to vector<8x1xf32>
    %18 = arith.addf %15, %17 : vector<8x1xf32>
    %c0_13 = arith.constant 0 : index
    %c0_14 = arith.constant 0 : index
    %19 = vector.load %arg11[%c0_13, %c0_14] : memref<8x1xf32, #tpu.memory_space<vmem>>, vector<8x1xf32>
    tpu.vector_store %arg11[%c0_13, %c0_14], %18 {strides = array<i32>} : memref<8x1xf32, #tpu.memory_space<vmem>>, vector<8x1xf32>,
    %c0_i32_15 = arith.constant 0 : i32
    %20 = arith.cmpi eq, %arg0, %c0_i32_15 : i32
    %21 = arith.extui %20 : i1 to i32
    %c0_i32_16 = arith.constant 0 : i32
    %22 = arith.cmpi ne, %21, %c0_i32_16 : i32
    scf.if %22 {
      %c0_17 = arith.constant 0 : index
      %c0_18 = arith.constant 0 : index
      %23 = vector.load %arg10[%c0_17, %c0_18] : memref<8x32xf32, #tpu.memory_space<vmem>>, vector<8x32xf32>
      %c0_19 = arith.constant 0 : index
      %c0_20 = arith.constant 0 : index
      %24 = vector.load %arg11[%c0_19, %c0_20] : memref<8x1xf32, #tpu.memory_space<vmem>>, vector<8x1xf32>
      %cst_21 = arith.constant 1.000000e+00 : f32
      %25 = vector.broadcast %cst_21 : f32 to vector<8x1xf32>
      %26 = arith.maximumf %24, %25 : vector<8x1xf32>
      %27 = tpu.reciprocal %26 : vector<8x1xf32> -> vector<8x1xf32>
      %28 = vector.broadcast %27 : vector<8x1xf32> to vector<8x32xf32>
      %29 = arith.mulf %23, %28 : vector<8x32xf32>
      %c0_22 = arith.constant 0 : index
      %c0_23 = arith.constant 0 : index
      %30 = vector.load %arg3[%c0_22, %c0_23] : memref<32x16xf32, #tpu.memory_space<vmem>>, vector<32x16xf32>
      %c0_24 = arith.constant 0 : index
      %c0_25 = arith.constant 0 : index
      %31 = vector.load %arg4[%c0_24, %c0_25] : memref<1x16xf32, #tpu.memory_space<vmem>>, vector<1x16xf32>
      %cst_26 = arith.constant dense<0.000000e+00> : vector<8x16xf32>
      %32 = tpu.matmul %29, %30, %cst_26 {dimension_numbers = #tpu.dot_dimension_numbers<[1], [0], [0], [1], [0, 0, 1, 1], [], []>} : vector<8x32xf32>, vector<32x16xf32>, vector<8x16xf32> -> vector<8x16xf32>
      %33 = vector.broadcast %31 : vector<1x16xf32> to vector<8x16xf32>
      %34 = arith.addf %32, %33 : vector<8x16xf32>
      %cst_27 = arith.constant 0.000000e+00 : f32
      %35 = vector.broadcast %cst_27 : f32 to vector<8x16xf32>
      %36 = arith.maximumf %34, %35 : vector<8x16xf32>
      %c0_28 = arith.constant 0 : index
      %c0_29 = arith.constant 0 : index
      %37 = vector.load %arg5[%c0_28, %c0_29] : memref<16x8xf32, #tpu.memory_space<vmem>>, vector<16x8xf32>
      %c0_30 = arith.constant 0 : index
      %c0_31 = arith.constant 0 : index
      %38 = vector.load %arg6[%c0_30, %c0_31] : memref<1x8xf32, #tpu.memory_space<vmem>>, vector<1x8xf32>
      %cst_32 = arith.constant dense<0.000000e+00> : vector<8x8xf32>
      %39 = tpu.matmul %36, %37, %cst_32 {dimension_numbers = #tpu.dot_dimension_numbers<[1], [0], [0], [1], [0, 0, 1, 1], [], []>} : vector<8x16xf32>, vector<16x8xf32>, vector<8x8xf32> -> vector<8x8xf32>
      %40 = vector.broadcast %38 : vector<1x8xf32> to vector<8x8xf32>
      %41 = arith.addf %39, %40 : vector<8x8xf32>
      %cst_33 = arith.constant 0.000000e+00 : f32
      %42 = vector.broadcast %cst_33 : f32 to vector<8x8xf32>
      %43 = arith.maximumf %41, %42 : vector<8x8xf32>
      %c0_34 = arith.constant 0 : index
      %c0_35 = arith.constant 0 : index
      %44 = vector.load %arg7[%c0_34, %c0_35] : memref<8x128xf32, #tpu.memory_space<vmem>>, vector<8x128xf32>
      %c0_36 = arith.constant 0 : index
      %c0_37 = arith.constant 0 : index
      %45 = vector.load %arg8[%c0_36, %c0_37] : memref<1x128xf32, #tpu.memory_space<vmem>>, vector<1x128xf32>
      %cst_38 = arith.constant dense<0.000000e+00> : vector<8x128xf32>
      %46 = tpu.matmul %43, %44, %cst_38 {dimension_numbers = #tpu.dot_dimension_numbers<[1], [0], [0], [1], [0, 0, 1, 1], [], []>} : vector<8x8xf32>, vector<8x128xf32>, vector<8x128xf32> -> vector<8x128xf32>
      %47 = vector.broadcast %45 : vector<1x128xf32> to vector<8x128xf32>
      %48 = arith.addf %46, %47 : vector<8x128xf32>
      %c0_39 = arith.constant 0 : index
      %c0_40 = arith.constant 0 : index
      %49 = vector.load %arg9[%c0_39, %c0_40] : memref<8x128xf32, #tpu.memory_space<vmem>>, vector<8x128xf32>
      tpu.vector_store %arg9[%c0_39, %c0_40], %48 {strides = array<i32>} : memref<8x128xf32, #tpu.memory_space<vmem>>, vector<8x128xf32>,
    } else {
    }
    return
  }
  func.func @transform_0(%arg0: i32) -> (i32, i32) {
    %c0_i32 = arith.constant 0 : i32
    %c0_i32_0 = arith.constant 0 : i32
    return %c0_i32, %arg0 : i32, i32
  }
  func.func @transform_1(%arg0: i32) -> (i32, i32) {
    %c0_i32 = arith.constant 0 : i32
    %c0_i32_0 = arith.constant 0 : i32
    return %arg0, %c0_i32 : i32, i32
  }
  func.func @transform_2(%arg0: i32) -> (i32, i32) {
    %c0_i32 = arith.constant 0 : i32
    %c0_i32_0 = arith.constant 0 : i32
    %c0_i32_1 = arith.constant 0 : i32
    return %c0_i32, %c0_i32_0 : i32, i32
  }
  func.func @transform_3(%arg0: i32) -> (i32, i32) {
    %c0_i32 = arith.constant 0 : i32
    %c0_i32_0 = arith.constant 0 : i32
    %c0_i32_1 = arith.constant 0 : i32
    return %c0_i32, %c0_i32_0 : i32, i32
  }
  func.func @transform_4(%arg0: i32) -> (i32, i32) {
    %c0_i32 = arith.constant 0 : i32
    %c0_i32_0 = arith.constant 0 : i32
    %c0_i32_1 = arith.constant 0 : i32
    return %c0_i32, %c0_i32_0 : i32, i32
  }
  func.func @transform_5(%arg0: i32) -> (i32, i32) {
    %c0_i32 = arith.constant 0 : i32
    %c0_i32_0 = arith.constant 0 : i32
    %c0_i32_1 = arith.constant 0 : i32
    return %c0_i32, %c0_i32_0 : i32, i32
  }
  func.func @transform_6(%arg0: i32) -> (i32, i32) {
    %c0_i32 = arith.constant 0 : i32
    %c0_i32_0 = arith.constant 0 : i32
    %c0_i32_1 = arith.constant 0 : i32
    return %c0_i32, %c0_i32_0 : i32, i32
  }
  func.func @transform_7(%arg0: i32) -> (i32, i32) {
    %c0_i32 = arith.constant 0 : i32
    %c0_i32_0 = arith.constant 0 : i32
    %c0_i32_1 = arith.constant 0 : i32
    return %c0_i32, %c0_i32_0 : i32, i32
  }
  func.func @transform_8(%arg0: i32) -> (i32, i32) {
    %c0_i32 = arith.constant 0 : i32
    %c0_i32_0 = arith.constant 0 : i32
    %c0_i32_1 = arith.constant 0 : i32
    return %c0_i32, %c0_i32_0 : i32, i32
  }
}

</mosaic_0001>

<llo_original>
// kernel: tpu_custom_call.1
$region0: #{tpu_custom_call.1}
  #allocation0 [shape = 'u32[]', space=smem, size = 0x4, offset = 0x4, fixed_abs, tag = 'smem constant byte address 0x4 - core index']
  #allocation1 [shape = 'u32[72,128]{1,0:T(1,128)}', space=vmem, size = 0x9000, scoped, tag = 'internal scratch']
  #allocation2 [shape = 'f32[8,32]{1,0:T(8,128)}', space=vmem, size = 0x1000, scoped, tag = 'scratch operand']
  #allocation3 [shape = 'f32[8,1]{1,0:T(8,128)}', space=vmem, size = 0x1000, scoped, tag = 'scratch operand']
  %s0 = inlined_call_operand.vmem [shape: s32[1,512], index: 0, kind: input, shape index: {}]
  %s1 = inlined_call_operand.vmem [shape: f32[512,32], index: 1, kind: input, shape index: {}]
  %s2 = inlined_call_operand.vmem [shape: f32[32,16], index: 2, kind: input, shape index: {}]
  %s3 = inlined_call_operand.vmem [shape: f32[1,16], index: 3, kind: input, shape index: {}]
  %s4 = inlined_call_operand.vmem [shape: f32[16,8], index: 4, kind: input, shape index: {}]
  %s5 = inlined_call_operand.vmem [shape: f32[1,8], index: 5, kind: input, shape index: {}]
  %s6 = inlined_call_operand.vmem [shape: f32[8,128], index: 6, kind: input, shape index: {}]
  %s7 = inlined_call_operand.vmem [shape: f32[1,128], index: 7, kind: input, shape index: {}]
  %s8 = inlined_call_operand.hbm [shape: f32[8,128], index: 8, kind: output, shape index: {}]
  %s9 = sld [smem:[#allocation0]]
  $region50: #{tpu_custom_call.1} parent=0
    _
  %s11 = ssub.s32 1, %s9
  %s12 = scalar_select 0, %s11, %s9
  $region1: #{tpu_custom_call.1} parent=0
    #allocation4 [shape = 'u8[4096]{0}', space=vmem, size = 0x1000, scoped, tag = 'output window, operand 0, single buffered']
    #allocation5 [shape = 's32[1]{0}', space=sflag, size = 0x4, scoped, tag = 'scoped memory for tpu_custom_call.1']
    %13 = vsyncpa [#allocation5], 0
    // Predicated region
    $region2: #{tpu_custom_call.1} parent=1 // pred_check
      _
    $region3: #{tpu_custom_call.1} parent=1 // pred_check_branch
      %15 = sbr.rel (0) target = $region5
    $region4: #{tpu_custom_call.1} parent=1 // pred_region
      _
    $region5: #{tpu_custom_call.1} parent=1 // pred_fallthru
      _
    // Predicated region
    $region6: #{tpu_custom_call.1} parent=1 // pred_check
      _
    $region7: #{tpu_custom_call.1} parent=1 // pred_check_branch
      %17 = sbr.rel (0) target = $region9
    $region8: #{tpu_custom_call.1} parent=1 // pred_region
      _
    $region9: #{tpu_custom_call.1} parent=1 // pred_fallthru
      _
    // Predicated region
    $region10: #{tpu_custom_call.1} parent=1 // pred_check
      _
    $region11: #{tpu_custom_call.1} parent=1 // pred_check_branch
      %19 = sbr.rel (0) target = $region13
    $region12: #{tpu_custom_call.1} parent=1 // pred_region
      _
    $region13: #{tpu_custom_call.1} parent=1 // pred_fallthru
      _
    // Predicated region
    $region14: #{tpu_custom_call.1} parent=1 // pred_check
      _
    $region15: #{tpu_custom_call.1} parent=1 // pred_check_branch
      %21 = sbr.rel (0) target = $region17
    $region16: #{tpu_custom_call.1} parent=1 // pred_region
      _
    $region17: #{tpu_custom_call.1} parent=1 // pred_fallthru
      _
    // Predicated region
    $region18: #{tpu_custom_call.1} parent=1 // pred_check
      _
    $region19: #{tpu_custom_call.1} parent=1 // pred_check_branch
      %23 = sbr.rel (0) target = $region21
    $region20: #{tpu_custom_call.1} parent=1 // pred_region
      _
    $region21: #{tpu_custom_call.1} parent=1 // pred_fallthru
      _
    // Predicated region
    $region22: #{tpu_custom_call.1} parent=1 // pred_check
      _
    $region23: #{tpu_custom_call.1} parent=1 // pred_check_branch
      %25 = sbr.rel (0) target = $region25
    $region24: #{tpu_custom_call.1} parent=1 // pred_region
      _
    $region25: #{tpu_custom_call.1} parent=1 // pred_fallthru
      _
    // Predicated region
    $region26: #{tpu_custom_call.1} parent=1 // pred_check
      _
    $region27: #{tpu_custom_call.1} parent=1 // pred_check_branch
      %27 = sbr.rel (0) target = $region29
    $region28: #{tpu_custom_call.1} parent=1 // pred_region
      _
    $region29: #{tpu_custom_call.1} parent=1 // pred_fallthru
      _
    // Predicated region
    $region30: #{tpu_custom_call.1} parent=1 // pred_check
      _
    $region31: #{tpu_custom_call.1} parent=1 // pred_check_branch
      %29 = sbr.rel (0) target = $region33
    $region32: #{tpu_custom_call.1} parent=1 // pred_region
      _
    $region33: #{tpu_custom_call.1} parent=1 // pred_fallthru
      _
    %p30 = scmp.eq.s32.totalorder 0, 0
    // Predicated region
    $region34: #{tpu_custom_call.1} parent=1 // pred_check
      %p31 = pneg %p30
    $region35: #{tpu_custom_call.1} parent=1 // pred_check_branch
      %33 = sbr.rel (%p31) target = $region37
    $region36: #{tpu_custom_call.1} parent=1 // pred_region
      %vm34 = vcmask 261120
      %35 = vst.msk [vmem:[#allocation2] sm:$0xff] %vm34, 0.0
      %vm36 = vcmask 7168
      %37 = vst.msk [vmem:[#allocation3] sm:$0xff] %vm36, 0.0
    $region37: #{tpu_custom_call.1} parent=1 // pred_fallthru
      _
    %v38 = vld [vmem:[%s0] sm:$0xf]
    %v39 = vlaneseq
    %v40 = vshrl.u32 %v39, 7
    %v41 = vperm.slane %v38, 0
    %v42 = vperm.slane %v38, 1
    %v43 = vperm.slane %v38, 2
    %v44 = vperm.slane %v38, 3
    %vm45 = vcmp.eq.s32.totalorder %v40, %v41
    %vm46 = vcmp.eq.s32.totalorder %v40, %v42
    %vm47 = vcmp.eq.s32.totalorder %v40, %v43
    %vm48 = vcmp.eq.s32.totalorder %v40, %v44
    %v49 = vsel %vm45, 1.0, 0.0
    %v50 = vsel %vm46, 1.0, 0.0
    %v51 = vsel %vm47, 1.0, 0.0
    %v52 = vsel %vm48, 1.0, 0.0
    %v53 = vld [vmem:[#allocation2] sm:$0xff]
    %v54 = vld [vmem:[%s1] sm:$0xff]
    %v55 = vld [vmem:[%s1 + $0x8] sm:$0xff]
    %v56 = vld [vmem:[%s1 + $0x10] sm:$0xff]
    %v57 = vld [vmem:[%s1 + $0x18] sm:$0xff]
    %v58 = vld [vmem:[%s1 + $0x20] sm:$0xff]
    %v59 = vld [vmem:[%s1 + $0x28] sm:$0xff]
    %v60 = vld [vmem:[%s1 + $0x30] sm:$0xff]
    %v61 = vld [vmem:[%s1 + $0x38] sm:$0xff]
    %v62 = vld [vmem:[%s1 + $0x40] sm:$0xff]
    %v63 = vld [vmem:[%s1 + $0x48] sm:$0xff]
    %v64 = vld [vmem:[%s1 + $0x50] sm:$0xff]
    %v65 = vld [vmem:[%s1 + $0x58] sm:$0xff]
    %v66 = vld [vmem:[%s1 + $0x60] sm:$0xff]
    %v67 = vld [vmem:[%s1 + $0x68] sm:$0xff]
    %v68 = vld [vmem:[%s1 + $0x70] sm:$0xff]
    %v69 = vld [vmem:[%s1 + $0x78] sm:$0xff]
    %v70 = vld [vmem:[%s1 + $0x80] sm:$0xff]
    %v71 = vld [vmem:[%s1 + $0x88] sm:$0xff]
    %v72 = vld [vmem:[%s1 + $0x90] sm:$0xff]
    %v73 = vld [vmem:[%s1 + $0x98] sm:$0xff]
    %v74 = vld [vmem:[%s1 + $0xa0] sm:$0xff]
    %v75 = vld [vmem:[%s1 + $0xa8] sm:$0xff]
    %v76 = vld [vmem:[%s1 + $0xb0] sm:$0xff]
    %v77 = vld [vmem:[%s1 + $0xb8] sm:$0xff]
    %v78 = vld [vmem:[%s1 + $0xc0] sm:$0xff]
    %v79 = vld [vmem:[%s1 + $0xc8] sm:$0xff]
    %v80 = vld [vmem:[%s1 + $0xd0] sm:$0xff]
    %v81 = vld [vmem:[%s1 + $0xd8] sm:$0xff]
    %v82 = vld [vmem:[%s1 + $0xe0] sm:$0xff]
    %v83 = vld [vmem:[%s1 + $0xe8] sm:$0xff]
    %v84 = vld [vmem:[%s1 + $0xf0] sm:$0xff]
    %v85 = vld [vmem:[%s1 + $0xf8] sm:$0xff]
    %v86 = vld [vmem:[%s1 + $0x100] sm:$0xff]
    %v87 = vld [vmem:[%s1 + $0x108] sm:$0xff]
    %v88 = vld [vmem:[%s1 + $0x110] sm:$0xff]
    %v89 = vld [vmem:[%s1 + $0x118] sm:$0xff]
    %v90 = vld [vmem:[%s1 + $0x120] sm:$0xff]
    %v91 = vld [vmem:[%s1 + $0x128] sm:$0xff]
    %v92 = vld [vmem:[%s1 + $0x130] sm:$0xff]
    %v93 = vld [vmem:[%s1 + $0x138] sm:$0xff]
    %v94 = vld [vmem:[%s1 + $0x140] sm:$0xff]
    %v95 = vld [vmem:[%s1 + $0x148] sm:$0xff]
    %v96 = vld [vmem:[%s1 + $0x150] sm:$0xff]
    %v97 = vld [vmem:[%s1 + $0x158] sm:$0xff]
    %v98 = vld [vmem:[%s1 + $0x160] sm:$0xff]
    %v99 = vld [vmem:[%s1 + $0x168] sm:$0xff]
    %v100 = vld [vmem:[%s1 + $0x170] sm:$0xff]
    %v101 = vld [vmem:[%s1 + $0x178] sm:$0xff]
    %v102 = vld [vmem:[%s1 + $0x180] sm:$0xff]
    %v103 = vld [vmem:[%s1 + $0x188] sm:$0xff]
    %v104 = vld [vmem:[%s1 + $0x190] sm:$0xff]
    %v105 = vld [vmem:[%s1 + $0x198] sm:$0xff]
    %v106 = vld [vmem:[%s1 + $0x1a0] sm:$0xff]
    %v107 = vld [vmem:[%s1 + $0x1a8] sm:$0xff]
    %v108 = vld [vmem:[%s1 + $0x1b0] sm:$0xff]
    %v109 = vld [vmem:[%s1 + $0x1b8] sm:$0xff]
    %v110 = vld [vmem:[%s1 + $0x1c0] sm:$0xff]
    %v111 = vld [vmem:[%s1 + $0x1c8] sm:$0xff]
    %v112 = vld [vmem:[%s1 + $0x1d0] sm:$0xff]
    %v113 = vld [vmem:[%s1 + $0x1d8] sm:$0xff]
    %v114 = vld [vmem:[%s1 + $0x1e0] sm:$0xff]
    %v115 = vld [vmem:[%s1 + $0x1e8] sm:$0xff]
    %v116 = vld [vmem:[%s1 + $0x1f0] sm:$0xff]
    %v117 = vld [vmem:[%s1 + $0x1f8] sm:$0xff]
    %118 = vmatpush.msra.mxu0 %v69
    %119 = vmatpush.msra.mxu0 %v68
    %120 = vmatpush.msra.mxu0 %v67
    %121 = vmatpush.msra.mxu0 %v66
    %122 = vmatpush.msra.mxu0 %v65
    %123 = vmatpush.msra.mxu0 %v64
    %124 = vmatpush.msra.mxu0 %v63
    %125 = vmatpush.msra.mxu0 %v62
    %126 = vmatpush.msra.mxu0 %v61
    %127 = vmatpush.msra.mxu0 %v60
    %128 = vmatpush.msra.mxu0 %v59
    %129 = vmatpush.msra.mxu0 %v58
    %130 = vmatpush.msra.mxu0 %v57
    %131 = vmatpush.msra.mxu0 %v56
    %132 = vmatpush.msra.mxu0 %v55
    %133 = vmatpush.msra.mxu0 %v54
    %134 = vmatmul.f32.gmra.mxu0 %v49
    %v135 = vpop.f32.mrf.mxu0
    %v136 = vadd.f32 0.0, %v135
    %137 = vdwg.mxu0
    %138 = vmatpush.msra.mxu0 %v85
    %139 = vmatpush.msra.mxu0 %v84
    %140 = vmatpush.msra.mxu0 %v83
    %141 = vmatpush.msra.mxu0 %v82
    %142 = vmatpush.msra.mxu0 %v81
    %143 = vmatpush.msra.mxu0 %v80
    %144 = vmatpush.msra.mxu0 %v79
    %145 = vmatpush.msra.mxu0 %v78
    %146 = vmatpush.msra.mxu0 %v77
    %147 = vmatpush.msra.mxu0 %v76
    %148 = vmatpush.msra.mxu0 %v75
    %149 = vmatpush.msra.mxu0 %v74
    %150 = vmatpush.msra.mxu0 %v73
    %151 = vmatpush.msra.mxu0 %v72
    %152 = vmatpush.msra.mxu0 %v71
    %153 = vmatpush.msra.mxu0 %v70
    %154 = vmatmul.f32.gmra.mxu0 %v50
    %v155 = vpop.f32.mrf.mxu0
    %v156 = vadd.f32 %v136, %v155
    %157 = vdwg.mxu0
    %158 = vmatpush.msra.mxu0 %v101
    %159 = vmatpush.msra.mxu0 %v100
    %160 = vmatpush.msra.mxu0 %v99
    %161 = vmatpush.msra.mxu0 %v98
    %162 = vmatpush.msra.mxu0 %v97
    %163 = vmatpush.msra.mxu0 %v96
    %164 = vmatpush.msra.mxu0 %v95
    %165 = vmatpush.msra.mxu0 %v94
    %166 = vmatpush.msra.mxu0 %v93
    %167 = vmatpush.msra.mxu0 %v92
    %168 = vmatpush.msra.mxu0 %v91
    %169 = vmatpush.msra.mxu0 %v90
    %170 = vmatpush.msra.mxu0 %v89
    %171 = vmatpush.msra.mxu0 %v88
    %172 = vmatpush.msra.mxu0 %v87
    %173 = vmatpush.msra.mxu0 %v86
    %174 = vmatmul.f32.gmra.mxu0 %v51
    %v175 = vpop.f32.mrf.mxu0
    %v176 = vadd.f32 %v156, %v175
    %177 = vdwg.mxu0
    %178 = vmatpush.msra.mxu0 %v117
    %179 = vmatpush.msra.mxu0 %v116
    %180 = vmatpush.msra.mxu0 %v115
    %181 = vmatpush.msra.mxu0 %v114
    %182 = vmatpush.msra.mxu0 %v113
    %183 = vmatpush.msra.mxu0 %v112
    %184 = vmatpush.msra.mxu0 %v111
    %185 = vmatpush.msra.mxu0 %v110
    %186 = vmatpush.msra.mxu0 %v109
    %187 = vmatpush.msra.mxu0 %v108
    %188 = vmatpush.msra.mxu0 %v107
    %189 = vmatpush.msra.mxu0 %v106
    %190 = vmatpush.msra.mxu0 %v105
    %191 = vmatpush.msra.mxu0 %v104
    %192 = vmatpush.msra.mxu0 %v103
    %193 = vmatpush.msra.mxu0 %v102
    %194 = vmatmul.f32.gmra.mxu0 %v52
    %v195 = vpop.f32.mrf.mxu0
    %v196 = vadd.f32 %v176, %v195
    %197 = vdwg.mxu0
    %v198 = vadd.f32 %v53, %v196
    %vm199 = vcmask 261120
    %200 = vst.msk [vmem:[#allocation2] sm:$0xff] %vm199, %v198
    %v201 = vld [vmem:[#allocation3] sm:$0xff]
    %v202 = vadd.f32 %v49, %v50
    %v203 = vadd.f32 %v202, %v51
    %v204 = vadd.f32 %v203, %v52
    %205 = vadd.xlane.f32.xlu0 %v204
    %v206 = vpop.xlane.xlu0 %205
    %v207 = vadd.f32 %v201, %v206
    %vm208 = vcmask 7168
    %209 = vst.msk [vmem:[#allocation3] sm:$0xff] %vm208, %v207
    // Predicated region
    $region38: #{tpu_custom_call.1} parent=1 // pred_check
      %p210 = pneg %p30
    $region39: #{tpu_custom_call.1} parent=1 // pred_check_branch
      %212 = sbr.rel (%p210) target = $region41
    $region40: #{tpu_custom_call.1} parent=1 // pred_region
      %v213 = vld [vmem:[#allocation2] sm:$0xff]
      %v214 = vld [vmem:[#allocation3] sm:$0xff]
      %v215 = vmax.f32 %v214, 1.0
      %v216 = vrcp.pop %v215
      %v217 = vmul.f32 %v215, %v216
      %v218 = vsub.f32 1.0, %v217
      %v219 = vmul.f32 %v216, %v218
      %v220 = vadd.f32 %v216, %v219
      %vm221 = vweird.f32 %v215
      %vm222 = vweird.f32 %v216
      %vm223 = vmor %vm221, %vm222
      %v224 = vsel %vm223, %v216, %v220
      %v225 = vand.u32 2147483647, %v215
      %vm226 = vcmp.eq.f32.partialorder %v225, 8.507059e+37
      %v227 = vand.u32 %v215, 2147483648
      %v228 = vor.u32 1.1754944e-38, %v227
      %v229 = vsel %vm226, %v228, %v224
      %231 = vset.pattern.permute.xlu0 0
      %232 = vperm.xlu0 %231, %v229
      %v233 = vpop.permute.xlu0 %232
      %v235 = vmul.f32 %v213, %v233
      %v236 = vld [vmem:[%s2] sm:$0xff]
      %v237 = vld [vmem:[%s2 + $0x8] sm:$0xff]
      %v238 = vld [vmem:[%s2 + $0x10] sm:$0xff]
      %v239 = vld [vmem:[%s2 + $0x18] sm:$0xff]
      %v240 = vld [vmem:[%s3] sm:$0x1]
      %v242 = vperm.slane %v240, 0
      %v245 = vsel %vm199, %v235, 0
      %247 = vmatpush.msra.mxu0 0.0
      %248 = vmatpush.msra.mxu0 0.0
      %249 = vmatpush.msra.mxu0 0.0
      %250 = vmatpush.msra.mxu0 0.0
      %251 = vmatpush.msra.mxu0 0.0
      %252 = vmatpush.msra.mxu0 0.0
      %253 = vmatpush.msra.mxu0 0.0
      %254 = vmatpush.msra.mxu0 0.0
      %255 = vmatpush.msra.mxu0 0.0
      %256 = vmatpush.msra.mxu0 0.0
      %257 = vmatpush.msra.mxu0 0.0
      %258 = vmatpush.msra.mxu0 0.0
      %259 = vmatpush.msra.mxu0 %v239
      %260 = vmatpush.msra.mxu0 %v238
      %261 = vmatpush.msra.mxu0 %v237
      %262 = vmatpush.msra.mxu0 %v236
      %263 = vmatmul.f32.gmra.mxu0 %v245
      %v264 = vpop.f32.mrf.mxu0
      %v265 = vadd.f32 %v242, %v264
      %266 = vdwg.mxu0
      %v267 = vmax.f32 %v265, 0.0
      %v268 = vld [vmem:[%s4] sm:$0xff]
      %v269 = vld [vmem:[%s4 + $0x8] sm:$0xff]
      %v270 = vld [vmem:[%s5] sm:$0x1]
      %v272 = vperm.slane %v270, 0
      %vm274 = vcmask 130048
      %v276 = vsel %vm274, %v267, 0
      %278 = vmatpush.msra.mxu0 0.0
      %279 = vmatpush.msra.mxu0 0.0
      %280 = vmatpush.msra.mxu0 0.0
      %281 = vmatpush.msra.mxu0 0.0
      %282 = vmatpush.msra.mxu0 0.0
      %283 = vmatpush.msra.mxu0 0.0
      %284 = vmatpush.msra.mxu0 0.0
      %285 = vmatpush.msra.mxu0 0.0
      %286 = vmatpush.msra.mxu0 0.0
      %287 = vmatpush.msra.mxu0 0.0
      %288 = vmatpush.msra.mxu0 0.0
      %289 = vmatpush.msra.mxu0 0.0
      %290 = vmatpush.msra.mxu0 0.0
      %291 = vmatpush.msra.mxu0 0.0
      %292 = vmatpush.msra.mxu0 %v269
      %293 = vmatpush.msra.mxu0 %v268
      %294 = vmatmul.f32.gmra.mxu0 %v276
      %v295 = vpop.f32.mrf.mxu0
      %v296 = vadd.f32 %v272, %v295
      %297 = vdwg.mxu0
      %v298 = vmax.f32 %v296, 0.0
      %v299 = vld [vmem:[%s6] sm:$0xff]
      %v300 = vld [vmem:[%s7] sm:$0x1]
      %v302 = vperm.slane %v300, 0
      %vm304 = vcmask 64512
      %v306 = vsel %vm304, %v298, 0
      %308 = vmatpush.msra.mxu0 0.0
      %309 = vmatpush.msra.mxu0 0.0
      %310 = vmatpush.msra.mxu0 0.0
      %311 = vmatpush.msra.mxu0 0.0
      %312 = vmatpush.msra.mxu0 0.0
      %313 = vmatpush.msra.mxu0 0.0
      %314 = vmatpush.msra.mxu0 0.0
      %315 = vmatpush.msra.mxu0 0.0
      %316 = vmatpush.msra.mxu0 0.0
      %317 = vmatpush.msra.mxu0 0.0
      %318 = vmatpush.msra.mxu0 0.0
      %319 = vmatpush.msra.mxu0 0.0
      %320 = vmatpush.msra.mxu0 0.0
      %321 = vmatpush.msra.mxu0 0.0
      %322 = vmatpush.msra.mxu0 0.0
      %323 = vmatpush.msra.mxu0 %v299
      %324 = vmatmul.f32.gmra.mxu0 %v306
      %v325 = vpop.f32.mrf.mxu0
      %v326 = vadd.f32 %v302, %v325
      %327 = vdwg.mxu0
      %328 = vst [vmem:[#allocation4] sm:$0xff] %v326
    $region41: #{tpu_custom_call.1} parent=1 // pred_fallthru
      _
    // Predicated region
    $region42: #{tpu_custom_call.1} parent=1 // pred_check
      _
    $region43: #{tpu_custom_call.1} parent=1 // pred_check_branch
      %330 = sbr.rel (0) target = $region45
    $region44: #{tpu_custom_call.1} parent=1 // pred_region
      %332 = vsyncadd [#allocation5], 0
      %s334 = sshll.u32 [#allocation4], 4
      %s335 = int_to_ptr.vmem [resolvable:$true] %s334
      %s336 = sshll.u32 %s8, 4
      %s337 = int_to_ptr.hbm [resolvable:$true] %s336
      %339 = dma.vmem_to_hbm [thread:$0]  %s335, 128, %s337, [#allocation5]
    $region45: #{tpu_custom_call.1} parent=1 // pred_fallthru
      _
    // Predicated region
    $region46: #{tpu_custom_call.1} parent=1 // pred_check
      _
    $region47: #{tpu_custom_call.1} parent=1 // pred_check_branch
      %341 = sbr.rel (0) target = $region49
    $region48: #{tpu_custom_call.1} parent=1 // pred_region
      %343 = dma.done [#allocation5], 128
    $region49: #{tpu_custom_call.1} parent=1 // pred_fallthru
      _
    %344 = vsyncpa [#allocation5], 1

</llo_original>
